<compile_context>
chip_gen: v5e
topology: v5e:2x2
jax: 0.10.0
libtpu: 0.0.40
codegen_flags: <defaults>
</compile_context>

<pallas_src>
import math
import functools

import jax
import jax.numpy as jnp
from jax.experimental import pallas as pl
from jax.experimental.pallas import tpu as pltpu

_LANE = 128
_TARGET_TILE_BYTES = 4 * 1024 * 1024   # ~4 MiB per-array tile (fewer grid steps)
_MIN_PALLAS_BYTES = 1 << 20            # below this, plain XLA add is cheaper
_VMEM_FLOOR = 32 * 1024 * 1024
_VMEM_CAP = 48 * 1024 * 1024           # leave headroom on v7x (64 MiB physical / TC)


def _sublane_unit(dtype) -> int:
    # Native sublane multiple: 8 for 4-byte, 16 for 2-byte, 32 for 1-byte dtypes.
    return max(8, 32 // jnp.dtype(dtype).itemsize)


def _round_down(x: int, m: int) -> int:
    return max(m, (x // m) * m)


def _round_up(x: int, m: int) -> int:
    return ((x + m - 1) // m) * m


def make_pos_embedding(emb_size: int, maxlen: int, dtype=jnp.float32):
    """Deterministic sinusoidal table, identical to the PyTorch __init__."""
    den = jnp.exp(-jnp.arange(0, emb_size, 2, dtype=jnp.float32)
                  * math.log(10000.0) / emb_size)            # (emb_size//2,)
    pos = jnp.arange(0, maxlen, dtype=jnp.float32)[:, None]  # (maxlen, 1)
    pe = jnp.zeros((maxlen, emb_size), dtype=jnp.float32)
    pe = pe.at[:, 0::2].set(jnp.sin(pos * den))
    pe = pe.at[:, 1::2].set(jnp.cos(pos * den))
    return pe.astype(dtype)


def _add_kernel(tok_ref, pos_ref, out_ref):
    # Broadcast add; pos_ref broadcasts over the leading (batch) dim(s) of the
    # token block. The astype is a no-op when dtypes already match.
    out_ref[...] = tok_ref[...].astype(out_ref.dtype) + pos_ref[...]


def _block_spec(shape, index_map, buffers=None):
    """BlockSpec with an optional explicit pipeline buffer count."""
    if buffers is not None:
        try:
            return pl.BlockSpec(shape, index_map, pipeline_mode=pl.Buffered(buffers))
        except TypeError:
            # Older jax without pipeline_mode support: fall back to default buffering.
            pass
    return pl.BlockSpec(shape, index_map)


def _compiler_params(vmem_need_bytes: int) -> pltpu.CompilerParams:
    return pltpu.CompilerParams(
        dimension_semantics=("parallel", "parallel"),
        vmem_limit_bytes=int(min(_VMEM_CAP, max(_VMEM_FLOOR, vmem_need_bytes))),
    )


@functools.partial(jax.jit, static_argnames=("force_pallas", "donate_token_emb"))
def positional_encoding_forward(token_emb: jax.Array,
                                pos_embedding: jax.Array,
                                *,
                                force_pallas: bool = False,
                                donate_token_emb: bool = False):
    """token_emb: (B, S, E); pos_embedding: (maxlen, E).  Returns (B, S, E)."""
    B, S, E = token_emb.shape
    maxlen, e_tbl = pos_embedding.shape
    if e_tbl != E:
        raise ValueError(f"pos_embedding emb dim {e_tbl} != token emb dim {E}")
    if S > maxlen:
        raise ValueError(f"sequence length {S} exceeds positional table maxlen {maxlen}")

    # PyTorch-style type promotion (fp32 table + bf16 activations -> fp32 result).
    out_dtype = jnp.promote_types(token_emb.dtype, pos_embedding.dtype)
    tok_isz = jnp.dtype(token_emb.dtype).itemsize
    out_isz = jnp.dtype(out_dtype).itemsize
    unit = _sublane_unit(token_emb.dtype)

    # ---- Small-input bail-out: let XLA fuse the tiny broadcast add. ----
    if (B * S * E * out_isz) < _MIN_PALLAS_BYTES and not force_pallas:
        return token_emb + pos_embedding[:S, :]

    alias = {0: 0} if (donate_token_emb and out_dtype == token_emb.dtype) else {}

    if E % _LANE == 0:
        # -------- Path A: E already lane-dense. Tile seq, fold batch into block. --------
        if pos_embedding.dtype == out_dtype:
            pos_tbl = pos_embedding                      # read rows straight from the table
        else:
            pos_tbl = pos_embedding[:S, :].astype(out_dtype)   # small one-time conversion

        max_rows = max(unit, _round_down(_TARGET_TILE_BYTES // (E * out_isz), unit))
        ts = S if S <= unit else min(_round_down(S, unit), max_rows)
        bb = max(1, min(B, _TARGET_TILE_BYTES // max(1, ts * E * out_isz)))
        n_s, n_b = pl.cdiv(S, ts), pl.cdiv(B, bb)

        # Guarantee >= 2 grid steps on a parallel axis so v7x's 2nd core isn't idle.
        if n_s * n_b < 2:
            if B >= 2:
                bb = (B + 1) // 2
            elif S > unit:
                half = _round_up((S + 1) // 2, unit)
                if half < S:
                    ts = half
            n_s, n_b = pl.cdiv(S, ts), pl.cdiv(B, bb)

        # pos block index is constant along the inner (batch) axis; when that axis has
        # >= 2 steps its re-DMA is already skipped there, so one buffer is enough.
        pos_bufs = 1 if n_b >= 2 else None
        vmem_need = (2 * bb * ts * E * (tok_isz + out_isz)
                     + (1 if pos_bufs == 1 else 2) * ts * E * out_isz
                     + (2 << 20))

        # Last seq block may extend past S (and past maxlen when S == maxlen): Pallas
        # masks the ragged output rows on writeback; exercised in the tests below.
        # TODO(synk): sweep pl.Buffered(3) on the token input on v7x once tiles final.
        return pl.pallas_call(
            _add_kernel,
            out_shape=jax.ShapeDtypeStruct((B, S, E), out_dtype),
            grid_spec=pltpu.PrefetchScalarGridSpec(
                num_scalar_prefetch=0,
                grid=(n_s, n_b),                      # seq-tiles outer, batch-tiles inner
                in_specs=[
                    pl.BlockSpec((bb, ts, E), lambda s, b: (b, s, 0)),     # token tile
                    _block_spec((ts, E), lambda s, b: (s, 0), buffers=pos_bufs),  # pos rows
                ],
                out_specs=pl.BlockSpec((bb, ts, E), lambda s, b: (b, s, 0)),
            ),
            compiler_params=_compiler_params(vmem_need),
            input_output_aliases=alias,
        )(token_emb, pos_tbl)

    # -------- Path B: E not a 128-multiple. Flatten to (B, S*E), lane-dense tiles. --------
    L = S * E
    tok2d = token_emb.reshape(B, L)
    # Tiny (S*E element) reshape of the needed table rows; negligible vs B*S*E traffic.
    pos2d = pos_embedding[:S, :].astype(out_dtype).reshape(1, L)

    tb = B if B <= unit else min(_round_down(B, unit), 8 * unit)
    max_cols = max(_LANE, _round_down(_TARGET_TILE_BYTES // (tb * out_isz), _LANE))
    tc = L if L <= _LANE else min(_round_down(L, _LANE), max_cols)
    n_c, n_b = pl.cdiv(L, tc), pl.cdiv(B, tb)

    if n_c * n_b < 2:  # keep v7x's second TensorCore busy
        if L > _LANE:
            half = _round_up((L + 1) // 2, _LANE)
            if half < L:
                tc = half
        elif B >= 2:
            tb = (B + 1) // 2
        n_c, n_b = pl.cdiv(L, tc), pl.cdiv(B, tb)

    pos_bufs = 1 if n_b >= 2 else None
    vmem_need = (2 * tb * tc * (tok_isz + out_isz)
                 + (1 if pos_bufs == 1 else 2) * tc * out_isz
                 + (2 << 20))

    # TODO(synk): when B < sublane unit and L % 128 == 0, a (B*L/tc, tc) reshape with a
    # modular pos index_map would make blocks fully sublane-dense (minor win, HBM-bound).
    out2d = pl.pallas_call(
        _add_kernel,
        out_shape=jax.ShapeDtypeStruct((B, L), out_dtype),
        grid_spec=pltpu.PrefetchScalarGridSpec(
            num_scalar_prefetch=0,
            grid=(n_c, n_b),                          # col-tiles outer, batch-tiles inner
            in_specs=[
                pl.BlockSpec((tb, tc), lambda c, b: (b, c)),                 # token tile
                _block_spec((1, tc), lambda c, b: (0, c), buffers=pos_bufs), # pos tile
            ],
            out_specs=pl.BlockSpec((tb, tc), lambda c, b: (b, c)),
        ),
        compiler_params=_compiler_params(vmem_need),
        input_output_aliases=alias,
    )(tok2d, pos2d)
    return out2d.reshape(B, S, E)


if __name__ == "__main__":
    # 1) Small shapes consistent with the module's forward (flattened Path B).
    B, S, E = 2, 8, 32
    MAXLEN = 64
    key = jax.random.PRNGKey(0)
    token_emb = jax.random.normal(key, (B, S, E), dtype=jnp.float32)
    pos_embedding = make_pos_embedding(E, MAXLEN, dtype=jnp.float32)
    ref = token_emb + pos_embedding[:S, :]

    out = jax.block_until_ready(
        positional_encoding_forward(token_emb, pos_embedding, force_pallas=True))
    assert out.shape == (B, S, E) and out.dtype == ref.dtype
    assert jnp.allclose(out, ref, atol=1e-6, rtol=1e-6), "mismatch (Path B, forced)"

    # Same small shapes through the default (XLA bail-out) path.
    out_xla = jax.block_until_ready(positional_encoding_forward(token_emb, pos_embedding))
    assert jnp.allclose(out_xla, ref, atol=1e-6, rtol=1e-6), "mismatch (bail-out path)"

    # 2) Lane-dense Path A at small shapes (E multiple of 128).
    B2, S2, E2 = 2, 16, 128
    tok2 = jax.random.normal(jax.random.PRNGKey(0), (B2, S2, E2), dtype=jnp.float32)
    pos2 = make_pos_embedding(E2, MAXLEN, dtype=jnp.float32)
    out2 = jax.block_until_ready(
        positional_encoding_forward(tok2, pos2, force_pallas=True))
    assert jnp.allclose(out2, tok2 + pos2[:S2, :], atol=1e-6, rtol=1e-6), "mismatch (Path A)"

    # 3) Ragged S with S == maxlen (last pos/out blocks extend past the array edge).
    B3, S3, E3, MAXLEN3 = 2, 20, 128, 20
    tok3 = jax.random.normal(jax.random.PRNGKey(0), (B3, S3, E3), dtype=jnp.float32)
    pos3 = make_pos_embedding(E3, MAXLEN3, dtype=jnp.float32)
    out3 = jax.block_until_ready(
        positional_encoding_forward(tok3, pos3, force_pallas=True))
    assert jnp.allclose(out3, tok3 + pos3[:S3, :], atol=1e-6, rtol=1e-6), "mismatch (ragged S)"

    # 4) Mixed precision: bf16 activations + fp32 table -> fp32 result (PyTorch promotion).
    tok4 = jax.random.normal(jax.random.PRNGKey(0), (B2, S2, E2), dtype=jnp.bfloat16)
    out4 = jax.block_until_ready(
        positional_encoding_forward(tok4, pos2, force_pallas=True))
    ref4 = tok4.astype(jnp.float32) + pos2[:S2, :]
    assert out4.dtype == jnp.float32
    assert jnp.allclose(out4, ref4, atol=1e-6, rtol=1e-6), "mismatch (bf16 + f32)"

    # 5) Medium shape that exercises the real (non-forced) Pallas path + aliasing.
    B5, S5, E5, MAXLEN5 = 2, 512, 512, 1024
    tok5 = jax.random.normal(jax.random.PRNGKey(0), (B5, S5, E5), dtype=jnp.float32)
    pos5 = make_pos_embedding(E5, MAXLEN5, dtype=jnp.float32)
    out5 = jax.block_until_ready(
        positional_encoding_forward(tok5, pos5, donate_token_emb=True))
    assert jnp.allclose(out5, tok5 + pos5[:S5, :], atol=1e-6, rtol=1e-6), "mismatch (medium)"

    print("KERNEL_OK")
</pallas_src>

<mosaic_0001>
module attributes {stable_mosaic.version = 11 : i64} {
  func.func @_add_kernel(%arg0: i32, %arg1: i32, %arg2: memref<2x128xf32, #tpu.memory_space<vmem>>, %arg3: memref<1x128xf32, #tpu.memory_space<vmem>>, %arg4: memref<2x128xf32, #tpu.memory_space<vmem>>) attributes {dimension_semantics = [#tpu.dimension_semantics<parallel>, #tpu.dimension_semantics<parallel>], iteration_bounds = array<i64: 2, 1>, scalar_prefetch = 0 : i64, scratch_operands = 0 : i64, tpu.core_type = #tpu.core_type<tc>, window_params = [{transform_indices = @transform_0, window_bounds = array<i64: 2, 128>}, {transform_indices = @transform_1, window_bounds = array<i64: 1, 128>}, {transform_indices = @transform_2, window_bounds = array<i64: 2, 128>}]} {
    %c0 = arith.constant 0 : index
    %c0_0 = arith.constant 0 : index
    %0 = vector.load %arg2[%c0, %c0_0] : memref<2x128xf32, #tpu.memory_space<vmem>>, vector<2x128xf32>
    %c0_1 = arith.constant 0 : index
    %c0_2 = arith.constant 0 : index
    %1 = vector.load %arg3[%c0_1, %c0_2] : memref<1x128xf32, #tpu.memory_space<vmem>>, vector<1x128xf32>
    %2 = vector.broadcast %1 : vector<1x128xf32> to vector<2x128xf32>
    %3 = arith.addf %0, %2 : vector<2x128xf32>
    %c0_3 = arith.constant 0 : index
    %c0_4 = arith.constant 0 : index
    %4 = vector.load %arg4[%c0_3, %c0_4] : memref<2x128xf32, #tpu.memory_space<vmem>>, vector<2x128xf32>
    tpu.vector_store %arg4[%c0_3, %c0_4], %3 {strides = array<i32>} : memref<2x128xf32, #tpu.memory_space<vmem>>, vector<2x128xf32>,
    return
  }
  func.func @transform_0(%arg0: i32, %arg1: i32) -> (i32, i32) {
    %c0_i32 = arith.constant 0 : i32
    return %arg1, %arg0 : i32, i32
  }
  func.func @transform_1(%arg0: i32, %arg1: i32) -> (i32, i32) {
    %c0_i32 = arith.constant 0 : i32
    %c0_i32_0 = arith.constant 0 : i32
    return %c0_i32, %arg0 : i32, i32
  }
  func.func @transform_2(%arg0: i32, %arg1: i32) -> (i32, i32) {
    %c0_i32 = arith.constant 0 : i32
    return %arg1, %arg0 : i32, i32
  }
}

</mosaic_0001>

<llo_original>
// kernel: positional_encoding_forward.1
$region0: #{positional_encoding_forward.1}
  #allocation0 [shape = 'u32[]', space=smem, size = 0x4, offset = 0x4, fixed_abs, tag = 'smem constant byte address 0x4 - core index']
  #allocation1 [shape = 'u32[72,128]{1,0:T(1,128)}', space=vmem, size = 0x9000, scoped, tag = 'internal scratch']
  %s0 = inlined_call_operand.vmem [shape: f32[2,256], index: 0, kind: input, shape index: {}]
  %s1 = inlined_call_operand.vmem [shape: f32[1,256], index: 1, kind: input, shape index: {}]
  %s2 = inlined_call_operand.vmem [shape: f32[2,256], index: 2, kind: output, shape index: {}]
  %s3 = sld [smem:[#allocation0]]
  $region41: #{positional_encoding_forward.1} parent=0
    _
  %s5 = ssub.s32 1, %s3
  %s6 = scalar_select 0, %s5, %s3
  loop: start=0, step=1, limit=4
  $region2: #{positional_encoding_forward.1} parent=0 // loop_pre_header
    _
  $region3: #{positional_encoding_forward.1} parent=0 // loop_header
    %s8 = sphi 0, %s12
    %p9 = scmp.ge.s32.totalorder %s8, 4
    %s15 = sphi 0, %s27
    %s16 = sphi 0, %s23
    %s17 = sphi 0, %s15
    %s18 = sphi 0, %s16
    %s19 = sphi 0, %s17
    %s20 = sphi 0, %s18
    %s32 = sphi 0, %s34
    %s35 = sphi 0, %s32
    %s36 = sphi 0, %s35
    %s52 = sphi 0, %s36
    %s58 = sphi 0, %s60
    %s61 = sphi 0, %s58
    %s62 = sphi 0, %s61
    %s78 = sphi 0, %s62
    %s86 = sphi 0, %s88
    %s89 = sphi 0, %s86
    %s90 = sphi 0, %s89
    %s106 = sphi 0, %s90
  $region4: #{positional_encoding_forward.1} parent=0 // loop_header_branch
    %11 = sbr.rel (%p9) target = $region8
  $region5: #{positional_encoding_forward.1} parent=0 // loop_body
    %s13 = ssub.s32 %s8, 1
    %s14 = ssub.s32 %s8, 2
    %s21 = sadd.s32 1, %s16
    %p22 = scmp.ge.s32.totalorder %s21, 1
    %s23 = scalar_select %p22, 0, %s21
    %s24 = sadd.s32 1, %s15
    %s25 = scalar_select %p22, %s24, %s15
    %p26 = scmp.ge.s32.totalorder %s25, 2
    %s27 = scalar_select %p26, 0, %s25
    %s28 = ssub.s32 %s16, %s23
    %s29 = ssub.s32 %s15, %s27
    %s30 = sor.u32 %s28, %s29
    %p31 = scmp.eq.s32.totalorder %s30, 0
    %s33 = sadd.s32 %s32, 1
    %s34 = scalar_select %p31, %s32, %s33
    %p37 = pneg %p31
    %p38 = scmp.eq.s32.totalorder %s8, 1
    %p39 = por %p37, %p38
    %p40 = scmp.ne.s32.totalorder %s32, %s35
    %p41 = scmp.eq.s32.totalorder %s8, 0
    %p42 = por %p40, %p41
    %p43 = scmp.ne.s32.totalorder %s32, %s35
    %p44 = scmp.eq.s32.totalorder %s13, 1
    %p45 = por %p43, %p44
    %p46 = scmp.ne.s32.totalorder %s35, %s36
    %p47 = scmp.eq.s32.totalorder %s13, 0
    %p48 = por %p46, %p47
    %p49 = scmp.ne.s32.totalorder %s35, %s36
    %p50 = scmp.eq.s32.totalorder %s14, 1
    %p51 = por %p49, %p50
    %p53 = scmp.ne.s32.totalorder %s36, %s52
    %p54 = scmp.eq.s32.totalorder %s14, 0
    %p55 = por %p53, %p54
    %s56 = ssub.s32 %s15, %s27
    %p57 = scmp.eq.s32.totalorder %s56, 0
    %s59 = sadd.s32 %s58, 1
    %s60 = scalar_select %p57, %s58, %s59
    %p63 = pneg %p57
    %p64 = scmp.eq.s32.totalorder %s8, 1
    %p65 = por %p63, %p64
    %p66 = scmp.ne.s32.totalorder %s58, %s61
    %p67 = scmp.eq.s32.totalorder %s8, 0
    %p68 = por %p66, %p67
    %p69 = scmp.ne.s32.totalorder %s58, %s61
    %p70 = scmp.eq.s32.totalorder %s13, 1
    %p71 = por %p69, %p70
    %p72 = scmp.ne.s32.totalorder %s61, %s62
    %p73 = scmp.eq.s32.totalorder %s13, 0
    %p74 = por %p72, %p73
    %p75 = scmp.ne.s32.totalorder %s61, %s62
    %p76 = scmp.eq.s32.totalorder %s14, 1
    %p77 = por %p75, %p76
    %p79 = scmp.ne.s32.totalorder %s62, %s78
    %p80 = scmp.eq.s32.totalorder %s14, 0
    %p81 = por %p79, %p80
    %s82 = ssub.s32 %s16, %s23
    %s83 = ssub.s32 %s15, %s27
    %s84 = sor.u32 %s82, %s83
    %p85 = scmp.eq.s32.totalorder %s84, 0
    %s87 = sadd.s32 %s86, 1
    %s88 = scalar_select %p85, %s86, %s87
    %p91 = pneg %p85
    %p92 = scmp.eq.s32.totalorder %s8, 1
    %p93 = por %p91, %p92
    %p94 = scmp.ne.s32.totalorder %s86, %s89
    %p95 = scmp.eq.s32.totalorder %s8, 0
    %p96 = por %p94, %p95
    %p97 = scmp.ne.s32.totalorder %s86, %s89
    %p98 = scmp.eq.s32.totalorder %s13, 1
    %p99 = por %p97, %p98
    %p100 = scmp.ne.s32.totalorder %s89, %s90
    %p101 = scmp.eq.s32.totalorder %s13, 0
    %p102 = por %p100, %p101
    %p103 = scmp.ne.s32.totalorder %s89, %s90
    %p104 = scmp.eq.s32.totalorder %s14, 1
    %p105 = por %p103, %p104
    %p107 = scmp.ne.s32.totalorder %s90, %s106
    %p108 = scmp.eq.s32.totalorder %s14, 0
    %p109 = por %p107, %p108
    %p110 = scmp.le.s32.totalorder 1, %s8
    %p111 = scmp.lt.s32.totalorder %s8, 3
    %p112 = pnand %p110, %p111
    %p113 = pneg %p112
    // Predicated region
    $region9: #{positional_encoding_forward.1} parent=5 // pred_check
      _
    $region10: #{positional_encoding_forward.1} parent=5 // pred_check_branch
      %115 = sbr.rel (%p112) target = $region12
    $region11: #{positional_encoding_forward.1} parent=5 // pred_region
      %s116 = ssub.s32 %s8, 1
    $region12: #{positional_encoding_forward.1} parent=5 // pred_fallthru
      _
    %p117 = scmp.lt.s32.totalorder %s8, 2
    // Predicated region
    $region13: #{positional_encoding_forward.1} parent=5 // pred_check
      %p118 = pneg %p117
    $region14: #{positional_encoding_forward.1} parent=5 // pred_check_branch
      %120 = sbr.rel (%p118) target = $region16
    $region15: #{positional_encoding_forward.1} parent=5 // pred_region
      // Predicated region
      $region17: #{positional_encoding_forward.1} parent=15 // pred_check
        %p121 = pneg %p42
      $region18: #{positional_encoding_forward.1} parent=15 // pred_check_branch
        %123 = sbr.rel (%p121) target = $region20
      $region19: #{positional_encoding_forward.1} parent=15 // pred_region
        %p124 = scmp.lt.s32.totalorder %s16, 0
        %s125 = scalar_select %p124, %s16, 0
        %p126 = scmp.lt.s32.totalorder %s15, 1
        %s127 = scalar_select %p126, %s15, 1
        %s128 = smul.addr %s125, 2
        %s129 = sadd.s32 %s127, %s128
        %s130 = smul.addr %s129, 2
        %s131 = scalar_lea.vmem %s0, %s130
      $region20: #{positional_encoding_forward.1} parent=15 // pred_fallthru
        _
      // Predicated region
      $region21: #{positional_encoding_forward.1} parent=15 // pred_check
        %p132 = pneg %p68
      $region22: #{positional_encoding_forward.1} parent=15 // pred_check_branch
        %134 = sbr.rel (%p132) target = $region24
      $region23: #{positional_encoding_forward.1} parent=15 // pred_region
        %p135 = scmp.lt.s32.totalorder %s15, 1
        %s136 = scalar_select %p135, %s15, 1
        %s137 = scalar_lea.vmem %s1, %s136
      $region24: #{positional_encoding_forward.1} parent=15 // pred_fallthru
        _
    $region16: #{positional_encoding_forward.1} parent=5 // pred_fallthru
      _
    %p138 = scmp.le.s32.totalorder 1, %s8
    %p139 = scmp.lt.s32.totalorder %s8, 3
    %p140 = pnand %p138, %p139
    %p141 = pneg %p140
    // Predicated region
    $region25: #{positional_encoding_forward.1} parent=5 // pred_check
      _
    $region26: #{positional_encoding_forward.1} parent=5 // pred_check_branch
      %143 = sbr.rel (%p140) target = $region28
    $region27: #{positional_encoding_forward.1} parent=5 // pred_region
      %s144 = ssub.s32 %s8, 1
      %p145 = scmp.lt.s32.totalorder %s18, 0
      %s146 = scalar_select %p145, %s18, 0
      %p147 = scmp.lt.s32.totalorder %s17, 1
      %s148 = scalar_select %p147, %s17, 1
      %s149 = smul.addr %s146, 2
      %s150 = sadd.s32 %s148, %s149
      %s151 = smul.addr %s150, 2
      %s152 = scalar_lea.vmem %s0, %s151
      %p153 = pneg %p48
      %p154 = pneg %p45
      %p155 = scmp.lt.s32.totalorder %s17, 1
      %s156 = scalar_select %p155, %s17, 1
      %s157 = scalar_lea.vmem %s1, %s156
      %p158 = pneg %p74
      %p159 = pneg %p71
      %p160 = pneg %p102
      %p161 = pneg %p99
      %p162 = scmp.lt.s32.totalorder %s18, 0
      %s163 = scalar_select %p162, %s18, 0
      %p164 = scmp.lt.s32.totalorder %s17, 1
      %s165 = scalar_select %p164, %s17, 1
      %s166 = smul.addr %s163, 2
      %s167 = sadd.s32 %s165, %s166
      %s168 = smul.addr %s167, 2
      %s169 = scalar_lea.vmem %s2, %s168
      %p170 = scmp.lt.s32.totalorder %s18, 0
      %s171 = scalar_select %p170, %s18, 0
      %p172 = scmp.lt.s32.totalorder %s17, 1
      %s173 = scalar_select %p172, %s17, 1
      %s174 = smul.addr %s171, 2
      %s175 = sadd.s32 %s173, %s174
      %s176 = smul.addr %s175, 2
      %s177 = scalar_lea.vmem %s0, %s176
      %p178 = scmp.lt.s32.totalorder %s17, 1
      %s179 = scalar_select %p178, %s17, 1
      %s180 = scalar_lea.vmem %s1, %s179
      %p181 = scmp.lt.s32.totalorder %s18, 0
      %s182 = scalar_select %p181, %s18, 0
      %p183 = scmp.lt.s32.totalorder %s17, 1
      %s184 = scalar_select %p183, %s17, 1
      %s185 = smul.addr %s182, 2
      %s186 = sadd.s32 %s184, %s185
      %s187 = smul.addr %s186, 2
      %s188 = scalar_lea.vmem %s2, %s187
      %v189 = vld [vmem:[%s177] sm:$0x3]
      %v190 = vld [vmem:[%s180] sm:$0x1]
      %v192 = vperm.slane %v190, 0
      %v194 = vadd.f32 %v189, %v192
      %195 = vst [vmem:[%s188] sm:$0x3] %v194
      %p196 = scmp.lt.s32.totalorder %s18, 0
      %s197 = scalar_select %p196, %s18, 0
      %p198 = scmp.lt.s32.totalorder %s17, 1
      %s199 = scalar_select %p198, %s17, 1
      %s200 = smul.addr %s197, 2
      %s201 = sadd.s32 %s199, %s200
      %s202 = smul.addr %s201, 2
      %s203 = scalar_lea.vmem %s2, %s202
      // Predicated region
      $region29: #{positional_encoding_forward.1} parent=27 // pred_check
        %p204 = pneg %p99
      $region30: #{positional_encoding_forward.1} parent=27 // pred_check_branch
        %206 = sbr.rel (%p204) target = $region32
      $region31: #{positional_encoding_forward.1} parent=27 // pred_region
        _
      $region32: #{positional_encoding_forward.1} parent=27 // pred_fallthru
        _
    $region28: #{positional_encoding_forward.1} parent=5 // pred_fallthru
      _
    %p207 = scmp.le.s32.totalorder 2, %s8
    // Predicated region
    $region33: #{positional_encoding_forward.1} parent=5 // pred_check
      %p208 = pneg %p207
    $region34: #{positional_encoding_forward.1} parent=5 // pred_check_branch
      %210 = sbr.rel (%p208) target = $region36
    $region35: #{positional_encoding_forward.1} parent=5 // pred_region
      %s211 = ssub.s32 %s8, 2
      // Predicated region
      $region37: #{positional_encoding_forward.1} parent=35 // pred_check
        %p212 = pneg %p105
      $region38: #{positional_encoding_forward.1} parent=35 // pred_check_branch
        %214 = sbr.rel (%p212) target = $region40
      $region39: #{positional_encoding_forward.1} parent=35 // pred_region
        %p215 = scmp.lt.s32.totalorder %s20, 0
        %s216 = scalar_select %p215, %s20, 0
        %p217 = scmp.lt.s32.totalorder %s19, 1
        %s218 = scalar_select %p217, %s19, 1
        %s219 = smul.addr %s216, 2
        %s220 = sadd.s32 %s218, %s219
        %s221 = smul.addr %s220, 2
        %s222 = scalar_lea.vmem %s2, %s221
      $region40: #{positional_encoding_forward.1} parent=35 // pred_fallthru
        _
    $region36: #{positional_encoding_forward.1} parent=5 // pred_fallthru
      _
  $region6: #{positional_encoding_forward.1} parent=0 // loop_footer
    %s12 = sadd.s32 1, %s8
  $region7: #{positional_encoding_forward.1} parent=0 // loop_footer_branch
    %7 = sbr.rel target = $region3
  $region8: #{positional_encoding_forward.1} parent=0 // loop_exit
    _

</llo_original>
